<compile_context>
chip_gen: v7x
topology: tpu7x:2x2x1
jax: 0.10.0
libtpu: 0.0.40
codegen_flags: <defaults>
</compile_context>

<pallas_src>
import functools

import jax
import jax.numpy as jnp
from jax.experimental import pallas as pl
from jax.experimental.pallas import tpu as pltpu

MARGIN = 2.0
EPS = 1e-6  # matches torch F.pairwise_distance default


def _round_up(x, m):
    return ((x + m - 1) // m) * m


def _cdiv(a, b):
    return -(-a // b)


def _contrastive_kernel(lab_ref, o1_ref, o2_ref, out_ref, *,
                        row_tile, n_rows, margin, need_mask):
    # Upcast in-kernel (native dtype on the wire keeps HBM traffic minimal).
    o1 = o1_ref[...].astype(jnp.float32)                       # (rt, D)
    o2 = o2_ref[...].astype(jnp.float32)                       # (rt, D)
    diff = o1 - o2 + EPS                                        # VPU
    d2 = jnp.sum(diff * diff, axis=-1, keepdims=True)           # (rt, 1) XLU reduce
    d = jnp.sqrt(d2)                                            # EUP (hinge only)
    lab = lab_ref[...].astype(jnp.float32)                      # (rt, 1)
    hinge = jnp.maximum(margin - d, 0.0)
    # positive term uses d2 directly (no sqrt->square round trip)
    per_row = lab * d2 + (1.0 - lab) * (hinge * hinge)           # (rt, 1)

    if need_mask:
        # Last block overhangs the batch; out-of-bounds rows hold undefined data.
        # jnp.where is a select, so any NaN/Inf garbage in masked rows is dropped.
        r0 = pl.program_id(0) * row_tile
        rows = jax.lax.broadcasted_iota(jnp.int32, per_row.shape, 0) + r0
        per_row = jnp.where(rows < n_rows, per_row, 0.0)

    # Per-tile partial sum -> single tiny store, grid stays fully "parallel".
    out_ref[...] = jnp.sum(per_row, axis=0, keepdims=True).reshape(1, 1, 1)


def _choose_row_tile(n, d, itemsize, vmem_budget_bytes=36 << 20):
    lane_d = _round_up(d, 128)
    # True VMEM cost per batch row:
    #   2 inputs x 2 pipeline buffers, lane-padded to 128  +  label (f32, lane-padded) x 2 buffers
    per_row_vmem = 4 * itemsize * lane_d + 2 * 4 * 128
    rt = max(8, (vmem_budget_bytes // per_row_vmem) // 8 * 8)
    # Give the v7x megacore >= ~4 grid steps on big batches, but never shrink
    # tiles below 512 rows (small tiles fall off the HBM roofline).
    rt = min(rt, max(_round_up(_cdiv(n, 4), 8), 512))
    rt = min(rt, _round_up(n, 8))
    return rt


def contrastive_loss(output1, output2, label, *, margin=MARGIN, row_tile=None):
    n, d = output1.shape
    assert output2.shape == (n, d)
    itemsize = jnp.dtype(output1.dtype).itemsize
    lab = jnp.asarray(label, jnp.float32).reshape(n, 1)   # tiny; inputs stay native dtype

    if row_tile is None:
        row_tile = _choose_row_tile(n, d, itemsize)
    row_tile = int(row_tile)
    if row_tile >= n:
        row_tile = n                      # full-dim block: always legal, no overhang
    else:
        row_tile = max(8, (row_tile // 8) * 8)

    num_tiles = _cdiv(n, row_tile)
    need_mask = (n % row_tile) != 0

    kernel = functools.partial(
        _contrastive_kernel,
        row_tile=row_tile, n_rows=n, margin=float(margin), need_mask=need_mask)

    # VMEM estimate with lane padding: 2 inputs x 2 buffers + label x 2 buffers.
    lane_d = _round_up(d, 128)
    vmem_est = 4 * row_tile * lane_d * itemsize + 2 * row_tile * 128 * 4 + (1 << 20)
    vmem_limit = int(min(48 << 20, max(vmem_est + (4 << 20), 16 << 20)))

    cost = pl.CostEstimate(
        flops=3 * n * d + 8 * n,
        transcendentals=n,
        bytes_accessed=2 * n * d * itemsize + 4 * n + 4 * num_tiles,
    )

    partials = pl.pallas_call(
        kernel,
        out_shape=jax.ShapeDtypeStruct((num_tiles, 1, 1), jnp.float32),
        grid_spec=pltpu.PrefetchScalarGridSpec(
            num_scalar_prefetch=0,
            grid=(num_tiles,),
            in_specs=[
                # label: small per-step tile, DMA hidden behind the big input DMAs
                pl.BlockSpec((row_tile, 1), lambda i: (i, 0)),
                # inputs: full (unpadded) D per block; row tail handled in-kernel
                pl.BlockSpec((row_tile, d), lambda i: (i, 0)),
                pl.BlockSpec((row_tile, d), lambda i: (i, 0)),
            ],
            out_specs=pl.BlockSpec((1, 1, 1), lambda i: (i, 0, 0)),
        ),
        compiler_params=pltpu.CompilerParams(
            # Blocks are fully independent (per-tile partial sums), so the axis
            # is "parallel" -> both TensorCores on v7x share the grid.
            dimension_semantics=("parallel",),
            vmem_limit_bytes=vmem_limit,
        ),
        cost_estimate=cost,
    )(lab, output1, output2)

    # num_tiles scalars -> negligible follow-up reduction; divide by the true N.
    return jnp.sum(partials) / jnp.float32(n)


def contrastive_loss_ref(output1, output2, label, margin=MARGIN):
    # pure-JAX reference mirroring F.pairwise_distance(keepdim=True)
    o1 = output1.astype(jnp.float32)
    o2 = output2.astype(jnp.float32)
    d = jnp.sqrt(jnp.sum((o1 - o2 + EPS) ** 2, axis=-1, keepdims=True))
    lab = jnp.asarray(label, jnp.float32).reshape(-1, 1)
    return jnp.mean(lab * d**2 + (1.0 - lab) * jnp.maximum(margin - d, 0.0) ** 2)


if __name__ == "__main__":
    key = jax.random.PRNGKey(0)

    # Case 1: the module's small demo shape (N=8 pairs, hidden=32) -> grid=(1,)
    k1, k2, k3 = jax.random.split(key, 3)
    N, D = 8, 32
    output1 = jax.random.normal(k1, (N, D), dtype=jnp.float32)
    output2 = jax.random.normal(k2, (N, D), dtype=jnp.float32)
    label = jax.random.bernoulli(k3, 0.5, (N, 1)).astype(jnp.float32)
    loss = contrastive_loss(output1, output2, label)
    jax.block_until_ready(loss)
    assert jnp.allclose(loss, contrastive_loss_ref(output1, output2, label),
                        rtol=1e-5, atol=1e-5)

    # Case 2: non-aligned shapes -> full-dim (20, 50) block, no padding anywhere.
    k4, k5, k6 = jax.random.split(jax.random.PRNGKey(1), 3)
    o1b = jax.random.normal(k4, (20, 50), dtype=jnp.float32)
    o2b = jax.random.normal(k5, (20, 50), dtype=jnp.float32)
    labb = jax.random.bernoulli(k6, 0.5, (20, 1)).astype(jnp.float32)
    loss_b = contrastive_loss(o1b, o2b, labb)
    jax.block_until_ready(loss_b)
    assert jnp.allclose(loss_b, contrastive_loss_ref(o1b, o2b, labb), rtol=1e-5, atol=1e-5)

    # Case 3: multi-step "parallel" grid (row_tile override), exact tiling.
    k7, k8, k9 = jax.random.split(jax.random.PRNGKey(2), 3)
    o1c = jax.random.normal(k7, (64, 32), dtype=jnp.float32)
    o2c = jax.random.normal(k8, (64, 32), dtype=jnp.float32)
    labc = jax.random.bernoulli(k9, 0.5, (64, 1)).astype(jnp.float32)
    loss_c = contrastive_loss(o1c, o2c, labc, row_tile=16)
    jax.block_until_ready(loss_c)
    assert jnp.allclose(loss_c, contrastive_loss_ref(o1c, o2c, labc), rtol=1e-5, atol=1e-5)

    # Case 4: row tail not divisible by the tile -> in-kernel row-mask path.
    k10, k11, k12 = jax.random.split(jax.random.PRNGKey(3), 3)
    o1d = jax.random.normal(k10, (100, 96), dtype=jnp.float32)
    o2d = jax.random.normal(k11, (100, 96), dtype=jnp.float32)
    labd = jax.random.bernoulli(k12, 0.5, (100, 1)).astype(jnp.float32)
    loss_d = contrastive_loss(o1d, o2d, labd, row_tile=16)
    jax.block_until_ready(loss_d)
    assert jnp.allclose(loss_d, contrastive_loss_ref(o1d, o2d, labd), rtol=1e-5, atol=1e-5)

    # Case 5: native bf16 inputs (no wrapper upcast), default tile heuristic.
    k13, k14, k15 = jax.random.split(jax.random.PRNGKey(4), 3)
    o1e = jax.random.normal(k13, (256, 256), dtype=jnp.bfloat16)
    o2e = jax.random.normal(k14, (256, 256), dtype=jnp.bfloat16)
    labe = jax.random.bernoulli(k15, 0.5, (256, 1)).astype(jnp.float32)
    loss_e = contrastive_loss(o1e, o2e, labe)
    jax.block_until_ready(loss_e)
    assert jnp.allclose(loss_e, contrastive_loss_ref(o1e, o2e, labe), rtol=1e-4, atol=1e-4)

    print("KERNEL_OK")
</pallas_src>

<mosaic_0001>
module attributes {stable_mosaic.version = 11 : i64} {
  func.func @_contrastive_kernel(%arg0: i32, %arg1: memref<8x1xf32, #tpu.memory_space<vmem>>, %arg2: memref<8x32xf32, #tpu.memory_space<vmem>>, %arg3: memref<8x32xf32, #tpu.memory_space<vmem>>, %arg4: memref<1x1x1xf32, #tpu.memory_space<vmem>>) attributes {dimension_semantics = [#tpu.dimension_semantics<parallel>], iteration_bounds = array<i64: 1>, scalar_prefetch = 0 : i64, scratch_operands = 0 : i64, tpu.core_type = #tpu.core_type<tc>, window_params = [{transform_indices = @transform_0, window_bounds = array<i64: 8, 1>}, {transform_indices = @transform_1, window_bounds = array<i64: 8, 32>}, {transform_indices = @transform_2, window_bounds = array<i64: 8, 32>}, {transform_indices = @transform_3, window_bounds = array<i64: 1, 1, 1>}]} {
    %c0 = arith.constant 0 : index
    %c0_0 = arith.constant 0 : index
    %0 = vector.load %arg2[%c0, %c0_0] : memref<8x32xf32, #tpu.memory_space<vmem>>, vector<8x32xf32>
    %c0_1 = arith.constant 0 : index
    %c0_2 = arith.constant 0 : index
    %1 = vector.load %arg3[%c0_1, %c0_2] : memref<8x32xf32, #tpu.memory_space<vmem>>, vector<8x32xf32>
    %2 = arith.subf %0, %1 : vector<8x32xf32>
    %cst = arith.constant 9.99999997E-7 : f32
    %3 = vector.broadcast %cst : f32 to vector<8x32xf32>
    %4 = arith.addf %2, %3 : vector<8x32xf32>
    %5 = arith.mulf %4, %4 : vector<8x32xf32>
    %cst_3 = arith.constant dense<0.000000e+00> : vector<8xf32>
    %6 = vector.multi_reduction <add>, %5, %cst_3 [1] : vector<8x32xf32> to vector<8xf32>
    %7 = vector.shape_cast %6 : vector<8xf32> to vector<8x1xf32>
    %8 = math.sqrt %7 : vector<8x1xf32>
    %c0_4 = arith.constant 0 : index
    %c0_5 = arith.constant 0 : index
    %9 = vector.load %arg1[%c0_4, %c0_5] : memref<8x1xf32, #tpu.memory_space<vmem>>, vector<8x1xf32>
    %cst_6 = arith.constant 2.000000e+00 : f32
    %10 = vector.broadcast %cst_6 : f32 to vector<8x1xf32>
    %11 = arith.subf %10, %8 : vector<8x1xf32>
    %cst_7 = arith.constant 0.000000e+00 : f32
    %12 = vector.broadcast %cst_7 : f32 to vector<8x1xf32>
    %13 = arith.maximumf %11, %12 : vector<8x1xf32>
    %14 = arith.mulf %9, %7 : vector<8x1xf32>
    %cst_8 = arith.constant 1.000000e+00 : f32
    %15 = vector.broadcast %cst_8 : f32 to vector<8x1xf32>
    %16 = arith.subf %15, %9 : vector<8x1xf32>
    %17 = arith.mulf %13, %13 : vector<8x1xf32>
    %18 = arith.mulf %16, %17 : vector<8x1xf32>
    %19 = arith.addf %14, %18 : vector<8x1xf32>
    %cst_9 = arith.constant dense<0.000000e+00> : vector<1xf32>
    %20 = vector.multi_reduction <add>, %19, %cst_9 [0] : vector<8x1xf32> to vector<1xf32>
    %21 = vector.shape_cast %20 : vector<1xf32> to vector<1x1xf32>
    %22 = vector.shape_cast %21 : vector<1x1xf32> to vector<1x1x1xf32>
    %c0_10 = arith.constant 0 : index
    %c0_11 = arith.constant 0 : index
    %c0_12 = arith.constant 0 : index
    %23 = vector.load %arg4[%c0_10, %c0_11, %c0_12] : memref<1x1x1xf32, #tpu.memory_space<vmem>>, vector<1x1x1xf32>
    tpu.vector_store %arg4[%c0_10, %c0_11, %c0_12], %22 {strides = array<i32>} : memref<1x1x1xf32, #tpu.memory_space<vmem>>, vector<1x1x1xf32>,
    return
  }
  func.func @transform_0(%arg0: i32) -> (i32, i32) {
    %c0_i32 = arith.constant 0 : i32
    %c0_i32_0 = arith.constant 0 : i32
    return %arg0, %c0_i32 : i32, i32
  }
  func.func @transform_1(%arg0: i32) -> (i32, i32) {
    %c0_i32 = arith.constant 0 : i32
    %c0_i32_0 = arith.constant 0 : i32
    return %arg0, %c0_i32 : i32, i32
  }
  func.func @transform_2(%arg0: i32) -> (i32, i32) {
    %c0_i32 = arith.constant 0 : i32
    %c0_i32_0 = arith.constant 0 : i32
    return %arg0, %c0_i32 : i32, i32
  }
  func.func @transform_3(%arg0: i32) -> (i32, i32, i32) {
    %c0_i32 = arith.constant 0 : i32
    %c0_i32_0 = arith.constant 0 : i32
    %c0_i32_1 = arith.constant 0 : i32
    return %arg0, %c0_i32, %c0_i32_0 : i32, i32, i32
  }
}

</mosaic_0001>

<llo_original>
// kernel: tpu_custom_call.1
$region0: #{tpu_custom_call.1}
  #allocation0 [shape = 'u32[]', space=smem, size = 0x4, offset = 0x4, fixed_abs, tag = 'smem constant byte address 0x4 - core index']
  #allocation1 [shape = 'u32[144,128]{1,0:T(1,128)}', space=vmem, size = 0x12000, scoped, tag = 'internal scratch']
  %s0 = inlined_call_operand.vmem [shape: f32[8,1], index: 0, kind: input, shape index: {}]
  %s1 = inlined_call_operand.vmem [shape: f32[8,32], index: 1, kind: input, shape index: {}]
  %s2 = inlined_call_operand.vmem [shape: f32[8,32], index: 2, kind: input, shape index: {}]
  %s3 = inlined_call_operand.hbm [shape: f32[1,1,1], index: 3, kind: output, shape index: {}]
  %s4 = sld [smem:[#allocation0]]
  $region22: #{tpu_custom_call.1} parent=0
    _
  %s6 = ssub.s32 1, %s4
  %s7 = scalar_select 0, %s6, %s4
  $region1: #{tpu_custom_call.1} parent=0
    #allocation2 [shape = 'u8[512]{0}', space=vmem, size = 0x400, scoped, tag = 'output window, operand 0, single buffered']
    #allocation3 [shape = 's32[1]{0}', space=sflag, size = 0x4, scoped, tag = 'scoped memory for tpu_custom_call.1']
    %8 = vsyncpa [#allocation3], 0
    // Predicated region
    $region2: #{tpu_custom_call.1} parent=1 // pred_check
      _
    $region3: #{tpu_custom_call.1} parent=1 // pred_check_branch
      %10 = sbr.rel (0) target = $region5
    $region4: #{tpu_custom_call.1} parent=1 // pred_region
      _
    $region5: #{tpu_custom_call.1} parent=1 // pred_fallthru
      _
    // Predicated region
    $region6: #{tpu_custom_call.1} parent=1 // pred_check
      _
    $region7: #{tpu_custom_call.1} parent=1 // pred_check_branch
      %12 = sbr.rel (0) target = $region9
    $region8: #{tpu_custom_call.1} parent=1 // pred_region
      _
    $region9: #{tpu_custom_call.1} parent=1 // pred_fallthru
      _
    // Predicated region
    $region10: #{tpu_custom_call.1} parent=1 // pred_check
      _
    $region11: #{tpu_custom_call.1} parent=1 // pred_check_branch
      %14 = sbr.rel (0) target = $region13
    $region12: #{tpu_custom_call.1} parent=1 // pred_region
      _
    $region13: #{tpu_custom_call.1} parent=1 // pred_fallthru
      _
    %v15 = vld [vmem:[%s1] sm:$0xff]
    %v16 = vld [vmem:[%s2] sm:$0xff]
    %v17 = vsub.f32 %v15, %v16
    %v18 = vadd.f32 %v17, 1e-06
    %v19 = vmul.f32 %v18, %v18
    %vm20 = vcmask 261120
    %v21 = vsel %vm20, %v19, 0.0
    %22 = vadd.xlane.f32.xlu0 %v21
    %v23 = vpop.xlane.xlu0 %22
    %v24 = vrsqrt.pop %v23
    %v25 = vmul.f32 %v23, %v24
    %vm26 = vcmp.eq.f32.partialorder %v23, inf
    %v27 = vsel %vm26, %v23, %v25
    %vm28 = vcmp.eq.f32.partialorder %v23, 0.0
    %v29 = vand.u32 %v23, 2147483648
    %v30 = vsel %vm28, %v29, %v27
    %v31 = vld [vmem:[%s0] sm:$0xff]
    %v32 = vsub.f32 2.0, %v30
    %v33 = vmax.f32 %v32, 0.0
    %v34 = vmul.f32 %v31, %v23
    %v35 = vsub.f32 1.0, %v31
    %v36 = vmul.f32 %v33, %v33
    %v37 = vmul.f32 %v35, %v36
    %v38 = vadd.f32 %v34, %v37
    %vm39 = vcmask 7168
    %v40 = vsel %vm39, %v38, 0.0
    %v41 = vrot.slane %v40, 4
    %v42 = vadd.f32 %v40, %v41
    %v43 = vrot.slane %v42, 2
    %v44 = vadd.f32 %v42, %v43
    %v45 = vrot.slane %v44, 1
    %v46 = vadd.f32 %v44, %v45
    %vm47 = vcmask 0
    %48 = vst.msk [vmem:[#allocation2] sm:$0x1] %vm47, %v46
    // Predicated region
    $region14: #{tpu_custom_call.1} parent=1 // pred_check
      _
    $region15: #{tpu_custom_call.1} parent=1 // pred_check_branch
      %50 = sbr.rel (0) target = $region17
    $region16: #{tpu_custom_call.1} parent=1 // pred_region
      %s52 = ssub.s32 16, 16
      %53 = vsyncadd [#allocation3], %s52
      %s55 = sshll.u32 [#allocation2], 4
      %s56 = int_to_ptr.vmem [resolvable:$true] %s55
      %58 = dma.vmem_to_hbm [thread:$0]  %s56, 16, %s3, [#allocation3]
    $region17: #{tpu_custom_call.1} parent=1 // pred_fallthru
      _
    // Predicated region
    $region18: #{tpu_custom_call.1} parent=1 // pred_check
      _
    $region19: #{tpu_custom_call.1} parent=1 // pred_check_branch
      %60 = sbr.rel (0) target = $region21
    $region20: #{tpu_custom_call.1} parent=1 // pred_region
      %61 = dma.done [#allocation3], 16
    $region21: #{tpu_custom_call.1} parent=1 // pred_fallthru
      _
    %62 = vsyncpa [#allocation3], 1

</llo_original>
